<compile_context>
chip_gen: v6e
topology: v6e:2x2x1
jax: 0.10.0
libtpu: 0.0.40
codegen_flags: <defaults>
</compile_context>

<pallas_src>
import functools

import jax
import jax.numpy as jnp
from jax.experimental import pallas as pl
from jax.experimental.pallas import tpu as pltpu

EPS = 1e-5


def _round_up(x, m):
    return (x + m - 1) // m * m


def _vmem_cap_bytes():
    """Physical VMEM per core; conservative fallback if the query fails."""
    try:
        info = pltpu.get_tpu_info()
        cap = getattr(info, "vmem_capacity_bytes", None)
        if cap:
            return int(cap)
    except Exception:
        pass
    return 64 * 2**20  # v7x-safe default


def _vmem_limit(estimate, cap):
    # Allow headroom over the static estimate, but never exceed ~85% of the
    # generation's physical VMEM (so 108 MiB on v5e/v6e, ~54 MiB on v7x).
    hi = int(0.85 * cap)
    return int(min(hi, max(int(1.5 * estimate), 32 * 2**20)))


def _choose_tb(B, batch_tile):
    """Batch tile / padded batch.  Ensures >= 2 tiles whenever the batch
    allows it so the 'parallel' grid axis can shard across 2 TensorCores."""
    Bp8 = _round_up(B, 8)
    tb = min(batch_tile, Bp8)
    if Bp8 >= 16:
        tb = min(tb, _round_up((Bp8 + 1) // 2, 8))
    tb = max(8, _round_up(tb, 8))
    Bp = _round_up(Bp8, tb)
    return tb, Bp


# ---------------------------------------------------------------------------
# Pass 1: [Linear + ReLU] x L  + packed per-tile BatchNorm partial statistics.
# ---------------------------------------------------------------------------
def mlp_stats_kernel(x_ref, w_ref, b_ref, h_ref, stats_ref, h_acc,
                     *, true_b, resident, acc_dtype):
    i = pl.program_id(0)                 # batch tile
    l = pl.program_id(1)                 # layer (sequential)
    last = pl.num_programs(1) - 1

    @pl.when(l == 0)
    def _():
        # Cast to the MXU input dtype once; identical to casting before the dot.
        h_acc[...] = x_ref[...].astype(acc_dtype)

    if resident:                         # all layers resident in VMEM
        wl = w_ref[l]                    # (Dp, Dp)
        bl = b_ref[l].astype(jnp.float32)        # (1, Dp)
    else:                                # streamed one layer per grid step
        wl = w_ref[0]
        bl = b_ref[0].astype(jnp.float32)

    h = h_acc[...]
    h_new = jnp.dot(h.astype(wl.dtype), wl,
                    preferred_element_type=jnp.float32) + bl
    h_new = jnp.maximum(h_new, 0.0)      # ReLU (f32, VPU)

    @pl.when(l < last)                   # skip the redundant store on the last layer
    def _():
        h_acc[...] = h_new.astype(acc_dtype)

    @pl.when(l == last)
    def _():
        h_ref[...] = h_new.astype(h_ref.dtype)
        tb = h_new.shape[0]
        # Mask batch-padding rows out of the BatchNorm statistics.
        row = jax.lax.broadcasted_iota(jnp.int32, (tb, 1), 0) + i * tb
        hm = jnp.where(row < true_b, h_new, 0.0)
        # NOTE: var = E[h^2] - mean^2 in f32; switch to shifted/Welford sums
        # if very deep/wide configs need tighter tolerance.
        s = jnp.sum(hm, axis=0, keepdims=True)        # (1, Dp)
        sq = jnp.sum(hm * hm, axis=0, keepdims=True)  # (1, Dp)
        # Pack both statistics into one (8, Dp) slab: rows 0-3 = sum,
        # rows 4-7 = sum of squares (single output DMA stream, unmasked vst).
        srow = jax.lax.broadcasted_iota(jnp.int32, stats_ref.shape, 0)
        stats_ref[...] = jnp.where(srow < 4,
                                   jnp.broadcast_to(s, stats_ref.shape),
                                   jnp.broadcast_to(sq, stats_ref.shape))


# ---------------------------------------------------------------------------
# Pass 2: fused BatchNorm (pre-folded scale/shift) + residual add.
# ---------------------------------------------------------------------------
def bn_residual_kernel(h_ref, x_ref, scale_ref, shift_ref, out_ref):
    h = h_ref[...].astype(jnp.float32)
    x = x_ref[...].astype(jnp.float32)
    out = h * scale_ref[...] + shift_ref[...] + x
    out_ref[...] = out.astype(out_ref.dtype)


def residual_block(x, weights, biases, gamma, beta, *, batch_tile=512):
    """x: (B, D) f32; weights: (L, D, D) laid out as (in, out) (f32 or bf16);
    biases: (L, D); gamma/beta: (D,).  Requires input_size == layer_size."""
    B, D = x.shape
    L = weights.shape[0]
    w_itm = weights.dtype.itemsize
    x_itm = x.dtype.itemsize

    # Lane-dense feature padding; prefer multiples of 256 (MXU width on
    # v6e/v7x) once D exceeds 128.
    Dp = _round_up(D, 128) if D <= 128 else _round_up(D, 256)
    TB, Bp = _choose_tb(B, batch_tile)
    nb = Bp // TB

    cap = _vmem_cap_bytes()

    xp = jnp.zeros((Bp, Dp), x.dtype).at[:B, :D].set(x)
    wp = jnp.zeros((L, Dp, Dp), weights.dtype).at[:, :D, :D].set(weights)
    bp = jnp.zeros((L, 1, Dp), jnp.float32).at[:, 0, :D].set(
        biases.astype(jnp.float32))
    gp = jnp.zeros((Dp,), jnp.float32).at[:D].set(gamma.astype(jnp.float32))
    bep = jnp.zeros((Dp,), jnp.float32).at[:D].set(beta.astype(jnp.float32))

    acc_itm = w_itm  # carry h in the MXU input dtype
    common = (2 * TB * Dp * x_itm      # x tile (double-buffered)
              + 2 * TB * Dp * 4        # h output tile (double-buffered)
              + 2 * 8 * Dp * 4         # packed stats slab
              + TB * Dp * acc_itm)     # h carry scratch
    w_resident_bytes = 2 * (L * Dp * Dp * w_itm + L * Dp * 4)
    resident = (w_resident_bytes + common) <= int(0.7 * cap)

    if resident:
        # Constant index_map -> weights/biases DMA'd once, stay resident.
        w_spec = pl.BlockSpec((L, Dp, Dp), lambda i, l: (0, 0, 0))
        b_spec = pl.BlockSpec((L, 1, Dp), lambda i, l: (0, 0, 0))
        est1 = w_resident_bytes + common
    else:
        # TODO(synk): for very large Dp on v7x, add an output-feature (N) tile
        # to the weight stream instead of requiring a full (Dp, Dp) block.
        w_spec = pl.BlockSpec((1, Dp, Dp), lambda i, l: (l, 0, 0))
        b_spec = pl.BlockSpec((1, 1, Dp), lambda i, l: (l, 0, 0))
        est1 = 2 * (Dp * Dp * w_itm + Dp * 4) + common

    h_out, stats = pl.pallas_call(
        functools.partial(mlp_stats_kernel, true_b=B, resident=resident,
                          acc_dtype=weights.dtype),
        out_shape=(
            jax.ShapeDtypeStruct((Bp, Dp), jnp.float32),
            jax.ShapeDtypeStruct((nb * 8, Dp), jnp.float32),
        ),
        grid=(nb, L),
        in_specs=[
            pl.BlockSpec((TB, Dp), lambda i, l: (i, 0)),   # x (resident over l)
            w_spec,
            b_spec,
        ],
        out_specs=(
            pl.BlockSpec((TB, Dp), lambda i, l: (i, 0)),
            pl.BlockSpec((8, Dp), lambda i, l: (i, 0)),
        ),
        scratch_shapes=[pltpu.VMEM((TB, Dp), weights.dtype)],
        compiler_params=pltpu.CompilerParams(
            dimension_semantics=("parallel", "arbitrary"),
            vmem_limit_bytes=_vmem_limit(est1, cap)),
    )(xp, wp, bp)

    # Aggregate BN statistics across batch tiles (tiny) and fold scale/shift.
    stats = stats.reshape(nb, 8, Dp)
    total = jnp.sum(stats[:, 0, :], axis=0)
    totalsq = jnp.sum(stats[:, 4, :], axis=0)
    mean = total / B
    var = jnp.maximum(totalsq / B - mean * mean, 0.0)
    scale = gp * jax.lax.rsqrt(var + EPS)
    shift = bep - mean * scale

    # Pass 2 uses its own (larger) batch tile -- pure memory-bound FMA.
    TB2 = TB
    while (TB2 * 2 <= 1024 and Bp % (TB2 * 2) == 0 and Bp // (TB2 * 2) >= 2):
        TB2 *= 2
    nb2 = Bp // TB2

    out_itm = x.dtype.itemsize
    est2 = 2 * (TB2 * Dp * 4 + TB2 * Dp * x_itm + 2 * Dp * 4 + TB2 * Dp * out_itm)
    aliases = {0: 0} if x.dtype == jnp.float32 else {}  # reuse h_out buffer

    out_p = pl.pallas_call(
        bn_residual_kernel,
        out_shape=jax.ShapeDtypeStruct((Bp, Dp), x.dtype),
        grid=(nb2,),
        in_specs=[
            pl.BlockSpec((TB2, Dp), lambda i: (i, 0)),
            pl.BlockSpec((TB2, Dp), lambda i: (i, 0)),
            pl.BlockSpec((1, Dp), lambda i: (0, 0)),
            pl.BlockSpec((1, Dp), lambda i: (0, 0)),
        ],
        out_specs=pl.BlockSpec((TB2, Dp), lambda i: (i, 0)),
        input_output_aliases=aliases,
        compiler_params=pltpu.CompilerParams(
            dimension_semantics=("parallel",),
            vmem_limit_bytes=_vmem_limit(est2, cap)),
    )(h_out, xp, scale.reshape(1, Dp), shift.reshape(1, Dp))

    return out_p[:B, :D]


# ---------------------------------------------------------------------------
# Pure-JAX reference (mirrors the kernel's MXU input dtype for apples-to-apples)
# ---------------------------------------------------------------------------
def reference(x, weights, biases, gamma, beta):
    h = x.astype(jnp.float32)
    for l in range(weights.shape[0]):
        h = jnp.dot(h.astype(weights.dtype), weights[l],
                    preferred_element_type=jnp.float32)
        h = jnp.maximum(h + biases[l].astype(jnp.float32), 0.0)
    mean = jnp.mean(h, axis=0, keepdims=True)
    var = jnp.mean((h - mean) ** 2, axis=0, keepdims=True)
    bn = (h - mean) * jax.lax.rsqrt(var + EPS) * gamma + beta
    return (bn + x.astype(jnp.float32)).astype(x.dtype)


if __name__ == "__main__":
    # Small shapes: batch=8, features (input_size == layer_size) = 32, layers=3.
    B, D, L = 8, 32, 3
    key = jax.random.PRNGKey(0)
    kx, kw, kb = jax.random.split(key, 3)

    x = jax.random.normal(kx, (B, D), dtype=jnp.float32)
    # nn.Linear-shaped parameters, pre-transposed to (in, out); weights stored
    # in bf16 (MXU-native), biases / BN params in f32.
    weights = (jax.random.normal(kw, (L, D, D), dtype=jnp.float32)
               * (1.0 / jnp.sqrt(D))).astype(jnp.bfloat16)
    biases = jax.random.normal(kb, (L, D), dtype=jnp.float32) * 0.01
    gamma = jnp.ones((D,), dtype=jnp.float32)   # BatchNorm1d weight init
    beta = jnp.zeros((D,), dtype=jnp.float32)   # BatchNorm1d bias init

    out = residual_block(x, weights, biases, gamma, beta)
    out = jax.block_until_ready(out)

    ref = reference(x, weights, biases, gamma, beta)
    assert out.shape == (B, D)
    assert jnp.allclose(out, ref, atol=1e-3, rtol=1e-3), "mismatch vs reference"

    print("KERNEL_OK")
</pallas_src>

<mosaic_0001>
module attributes {stable_mosaic.version = 11 : i64} {
  func.func @mlp_stats_kernel(%arg0: i32, %arg1: i32, %arg2: memref<8x128xf32, #tpu.memory_space<vmem>>, %arg3: memref<3x128x128xbf16, #tpu.memory_space<vmem>>, %arg4: memref<3x1x128xf32, #tpu.memory_space<vmem>>, %arg5: memref<8x128xf32, #tpu.memory_space<vmem>>, %arg6: memref<8x128xf32, #tpu.memory_space<vmem>>, %arg7: memref<8x128xbf16, #tpu.memory_space<vmem>>) attributes {dimension_semantics = [#tpu.dimension_semantics<parallel>, #tpu.dimension_semantics<arbitrary>], iteration_bounds = array<i64: 1, 3>, scalar_prefetch = 0 : i64, scratch_operands = 1 : i64, tpu.core_type = #tpu.core_type<tc>, window_params = [{transform_indices = @transform_0, window_bounds = array<i64: 8, 128>}, {pipeline_mode = #tpu.pipeline_mode<synchronous>, transform_indices = @transform_1, window_bounds = array<i64: 3, 128, 128>}, {pipeline_mode = #tpu.pipeline_mode<synchronous>, transform_indices = @transform_2, window_bounds = array<i64: 3, 1, 128>}, {transform_indices = @transform_3, window_bounds = array<i64: 8, 128>}, {transform_indices = @transform_4, window_bounds = array<i64: 8, 128>}]} {
    %c0_i32 = arith.constant 0 : i32
    %0 = arith.cmpi eq, %arg1, %c0_i32 : i32
    %1 = arith.extui %0 : i1 to i32
    %c0_i32_0 = arith.constant 0 : i32
    %2 = arith.cmpi ne, %1, %c0_i32_0 : i32
    scf.if %2 {
      %c0_10 = arith.constant 0 : index
      %c0_11 = arith.constant 0 : index
      %21 = vector.load %arg2[%c0_10, %c0_11] : memref<8x128xf32, #tpu.memory_space<vmem>>, vector<8x128xf32>
      %22 = arith.truncf %21 : vector<8x128xf32> to vector<8x128xbf16>
      %c0_12 = arith.constant 0 : index
      %c0_13 = arith.constant 0 : index
      %23 = vector.load %arg7[%c0_12, %c0_13] : memref<8x128xbf16, #tpu.memory_space<vmem>>, vector<8x128xbf16>
      tpu.vector_store %arg7[%c0_12, %c0_13], %22 {strides = array<i32>} : memref<8x128xbf16, #tpu.memory_space<vmem>>, vector<8x128xbf16>,
    } else {
    }
    %3 = arith.index_cast %arg1 : i32 to index
    %c0 = arith.constant 0 : index
    %c0_1 = arith.constant 0 : index
    %4 = vector.load %arg3[%3, %c0, %c0_1] : memref<3x128x128xbf16, #tpu.memory_space<vmem>>, vector<1x128x128xbf16>
    %5 = vector.shape_cast %4 : vector<1x128x128xbf16> to vector<128x128xbf16>
    %6 = arith.index_cast %arg1 : i32 to index
    %c0_2 = arith.constant 0 : index
    %c0_3 = arith.constant 0 : index
    %7 = vector.load %arg4[%6, %c0_2, %c0_3] : memref<3x1x128xf32, #tpu.memory_space<vmem>>, vector<1x1x128xf32>
    %8 = vector.shape_cast %7 : vector<1x1x128xf32> to vector<1x128xf32>
    %c0_4 = arith.constant 0 : index
    %c0_5 = arith.constant 0 : index
    %9 = vector.load %arg7[%c0_4, %c0_5] : memref<8x128xbf16, #tpu.memory_space<vmem>>, vector<8x128xbf16>
    %cst = arith.constant dense<0.000000e+00> : vector<8x128xf32>
    %10 = tpu.matmul %9, %5, %cst {dimension_numbers = #tpu.dot_dimension_numbers<[1], [0], [0], [1], [0, 0, 1, 1], [], []>} : vector<8x128xbf16>, vector<128x128xbf16>, vector<8x128xf32> -> vector<8x128xf32>
    %11 = vector.broadcast %8 : vector<1x128xf32> to vector<8x128xf32>
    %12 = arith.addf %10, %11 : vector<8x128xf32>
    %cst_6 = arith.constant 0.000000e+00 : f32
    %13 = vector.broadcast %cst_6 : f32 to vector<8x128xf32>
    %14 = arith.maximumf %12, %13 : vector<8x128xf32>
    %c2_i32 = arith.constant 2 : i32
    %15 = arith.cmpi slt, %arg1, %c2_i32 : i32
    %16 = arith.extui %15 : i1 to i32
    %c0_i32_7 = arith.constant 0 : i32
    %17 = arith.cmpi ne, %16, %c0_i32_7 : i32
    scf.if %17 {
      %21 = arith.truncf %14 : vector<8x128xf32> to vector<8x128xbf16>
      %c0_10 = arith.constant 0 : index
      %c0_11 = arith.constant 0 : index
      %22 = vector.load %arg7[%c0_10, %c0_11] : memref<8x128xbf16, #tpu.memory_space<vmem>>, vector<8x128xbf16>
      tpu.vector_store %arg7[%c0_10, %c0_11], %21 {strides = array<i32>} : memref<8x128xbf16, #tpu.memory_space<vmem>>, vector<8x128xbf16>,
    } else {
    }
    %c2_i32_8 = arith.constant 2 : i32
    %18 = arith.cmpi eq, %arg1, %c2_i32_8 : i32
    %19 = arith.extui %18 : i1 to i32
    %c0_i32_9 = arith.constant 0 : i32
    %20 = arith.cmpi ne, %19, %c0_i32_9 : i32
    scf.if %20 {
      %c0_10 = arith.constant 0 : index
      %c0_11 = arith.constant 0 : index
      %21 = vector.load %arg5[%c0_10, %c0_11] : memref<8x128xf32, #tpu.memory_space<vmem>>, vector<8x128xf32>
      tpu.vector_store %arg5[%c0_10, %c0_11], %14 {strides = array<i32>} : memref<8x128xf32, #tpu.memory_space<vmem>>, vector<8x128xf32>,
      %22 = tpu.iota {dimensions = array<i32: 0>} : vector<8x1xi32>
      %c8_i32 = arith.constant 8 : i32
      %23 = arith.muli %arg0, %c8_i32 : i32
      %24 = vector.broadcast %23 : i32 to vector<8x1xi32>
      %25 = arith.addi %22, %24 : vector<8x1xi32>
      %c8_i32_12 = arith.constant 8 : i32
      %26 = vector.broadcast %c8_i32_12 : i32 to vector<8x1xi32>
      %27 = arith.cmpi slt, %25, %26 : vector<8x1xi32>
      %cst_13 = arith.constant 0.000000e+00 : f32
      %28 = vector.shape_cast %27 : vector<8x1xi1> to vector<8x1xi1>
      %29 = vector.broadcast %28 : vector<8x1xi1> to vector<8x128xi1>
      %30 = vector.broadcast %cst_13 : f32 to vector<8x128xf32>
      %31 = arith.select %29, %14, %30 : vector<8x128xi1>, vector<8x128xf32>
      %cst_14 = arith.constant dense<0.000000e+00> : vector<128xf32>
      %32 = vector.multi_reduction <add>, %31, %cst_14 [0] : vector<8x128xf32> to vector<128xf32>
      %33 = vector.shape_cast %32 : vector<128xf32> to vector<1x128xf32>
      %34 = arith.mulf %31, %31 : vector<8x128xf32>
      %cst_15 = arith.constant dense<0.000000e+00> : vector<128xf32>
      %35 = vector.multi_reduction <add>, %34, %cst_15 [0] : vector<8x128xf32> to vector<128xf32>
      %36 = vector.shape_cast %35 : vector<128xf32> to vector<1x128xf32>
      %37 = tpu.iota {dimensions = array<i32: 0>} : vector<8x128xi32>
      %c4_i32 = arith.constant 4 : i32
      %38 = vector.broadcast %c4_i32 : i32 to vector<8x128xi32>
      %39 = arith.cmpi slt, %37, %38 : vector<8x128xi32>
      %40 = vector.shape_cast %33 : vector<1x128xf32> to vector<1x128xf32>
      %41 = vector.broadcast %40 : vector<1x128xf32> to vector<8x128xf32>
      %42 = vector.shape_cast %36 : vector<1x128xf32> to vector<1x128xf32>
      %43 = vector.broadcast %42 : vector<1x128xf32> to vector<8x128xf32>
      %44 = arith.select %39, %41, %43 : vector<8x128xi1>, vector<8x128xf32>
      %c0_16 = arith.constant 0 : index
      %c0_17 = arith.constant 0 : index
      %45 = vector.load %arg6[%c0_16, %c0_17] : memref<8x128xf32, #tpu.memory_space<vmem>>, vector<8x128xf32>
      tpu.vector_store %arg6[%c0_16, %c0_17], %44 {strides = array<i32>} : memref<8x128xf32, #tpu.memory_space<vmem>>, vector<8x128xf32>,
    } else {
    }
    return
  }
  func.func @transform_0(%arg0: i32, %arg1: i32) -> (i32, i32) {
    %c0_i32 = arith.constant 0 : i32
    %c0_i32_0 = arith.constant 0 : i32
    return %arg0, %c0_i32 : i32, i32
  }
  func.func @transform_1(%arg0: i32, %arg1: i32) -> (i32, i32, i32) {
    %c0_i32 = arith.constant 0 : i32
    %c0_i32_0 = arith.constant 0 : i32
    %c0_i32_1 = arith.constant 0 : i32
    %c0_i32_2 = arith.constant 0 : i32
    return %c0_i32, %c0_i32_0, %c0_i32_1 : i32, i32, i32
  }
  func.func @transform_2(%arg0: i32, %arg1: i32) -> (i32, i32, i32) {
    %c0_i32 = arith.constant 0 : i32
    %c0_i32_0 = arith.constant 0 : i32
    %c0_i32_1 = arith.constant 0 : i32
    %c0_i32_2 = arith.constant 0 : i32
    return %c0_i32, %c0_i32_0, %c0_i32_1 : i32, i32, i32
  }
  func.func @transform_3(%arg0: i32, %arg1: i32) -> (i32, i32) {
    %c0_i32 = arith.constant 0 : i32
    %c0_i32_0 = arith.constant 0 : i32
    return %arg0, %c0_i32 : i32, i32
  }
  func.func @transform_4(%arg0: i32, %arg1: i32) -> (i32, i32) {
    %c0_i32 = arith.constant 0 : i32
    %c0_i32_0 = arith.constant 0 : i32
    return %arg0, %c0_i32 : i32, i32
  }
}

</mosaic_0001>

<llo_original>
// kernel: tpu_custom_call.1
$region0: #{tpu_custom_call.1}
  #allocation0 [shape = 'u32[]', space=smem, size = 0x4, offset = 0x4, fixed_abs, tag = 'smem constant byte address 0x4 - core index']
  #allocation1 [shape = 'u32[144,128]{1,0:T(1,128)}', space=vmem, size = 0x12000, scoped, tag = 'internal scratch']
  #allocation2 [shape = 'bf16[8,128]{1,0:T(8,128)(2,1)}', space=vmem, size = 0x800, scoped, tag = 'scratch operand']
  %s0 = inlined_call_operand.hbm [shape: f32[8,128], index: 0, kind: input, shape index: {}]
  %s1 = inlined_call_operand.hbm [shape: bf16[3,128,128], index: 1, kind: input, shape index: {}]
  %s2 = inlined_call_operand.vmem [shape: f32[3,1,128], index: 2, kind: input, shape index: {}]
  %s3 = inlined_call_operand.hbm [shape: f32[8,128], index: 3, kind: output, shape index: {0}]
  %s4 = inlined_call_operand.hbm [shape: f32[8,128], index: 4, kind: output, shape index: {1}]
  %5 = xla_tuple %s3, %s4
  %s6 = sld [smem:[#allocation0]]
  $region73: #{tpu_custom_call.1} parent=0
    _
  %s8 = ssub.s32 1, %s6
  %s9 = scalar_select 0, %s8, %s6
  $region1: #{tpu_custom_call.1} parent=0
    #allocation3 [shape = 'u8[4096]{0}', space=vmem, size = 0x1000, scoped, tag = 'input window, operand 0, single buffered']
    #allocation4 [shape = 's32[2]{0}', space=sflag, size = 0x8, scoped, tag = 'scoped memory for tpu_custom_call.1']
    #allocation5 [shape = 's32[2]{0}', space=sflag, size = 0x8, scoped, tag = 'scoped memory for tpu_custom_call.1']
    #allocation6 [shape = 'u8[98304]{0}', space=vmem, size = 0x18000, scoped, tag = 'input window, operand 1, single buffered']
    #allocation7 [shape = 's32[1]{0}', space=sflag, size = 0x4, scoped, tag = 'scoped memory for tpu_custom_call.1']
    #allocation8 [shape = 'u8[4096]{0}', space=vmem, size = 0x1000, scoped, tag = 'output window, operand 0, single buffered']
    #allocation9 [shape = 'u8[4096]{0}', space=vmem, size = 0x1000, scoped, tag = 'output window, operand 1, single buffered']
    #allocation10 [shape = 's32[1]{0}', space=sflag, size = 0x4, scoped, tag = 'scoped memory for tpu_custom_call.1']
    %10 = vsyncpa [#allocation4], 0
    %11 = vsyncpa [#allocation7], 0
    %12 = vsyncpa [#allocation5], 0
    %13 = vsyncpa [#allocation10], 0
    loop: start=0, step=1, limit=5
    $region2: #{tpu_custom_call.1} parent=1 // loop_pre_header
      _
    $region3: #{tpu_custom_call.1} parent=1 // loop_header
      %s15 = sphi 0, %s19
      %p16 = scmp.ge.s32.totalorder %s15, 5
      %s22 = sphi 0, %s34
      %s23 = sphi 0, %s30
      %s24 = sphi 0, %s22
      %s25 = sphi 0, %s23
      %s26 = sphi 0, %s24
      %s27 = sphi 0, %s25
      %s37 = sphi 0, %s39
      %s40 = sphi 0, %s37
      %s41 = sphi 0, %s40
      %s57 = sphi 0, %s41
      %s61 = sphi 0, %s61
      %s63 = sphi 0, %s61
      %s64 = sphi 0, %s63
      %s78 = sphi 0, %s64
      %s82 = sphi 0, %s82
      %s84 = sphi 0, %s82
      %s85 = sphi 0, %s84
      %s99 = sphi 0, %s85
      %s105 = sphi 0, %s107
      %s108 = sphi 0, %s105
      %s109 = sphi 0, %s108
      %s125 = sphi 0, %s109
      %s131 = sphi 0, %s133
      %s134 = sphi 0, %s131
      %s135 = sphi 0, %s134
      %s151 = sphi 0, %s135
    $region4: #{tpu_custom_call.1} parent=1 // loop_header_branch
      %18 = sbr.rel (%p16) target = $region8
    $region5: #{tpu_custom_call.1} parent=1 // loop_body
      %s20 = ssub.s32 %s15, 1
      %s21 = ssub.s32 %s15, 2
      %s28 = sadd.s32 1, %s23
      %p29 = scmp.ge.s32.totalorder %s28, 3
      %s30 = scalar_select %p29, 0, %s28
      %s31 = sadd.s32 1, %s22
      %s32 = scalar_select %p29, %s31, %s22
      %p33 = scmp.ge.s32.totalorder %s32, 1
      %s34 = scalar_select %p33, 0, %s32
      %s35 = ssub.s32 %s22, %s34
      %p36 = scmp.eq.s32.totalorder %s35, 0
      %s38 = sadd.s32 %s37, 1
      %s39 = scalar_select %p36, %s37, %s38
      %p42 = pneg %p36
      %p43 = scmp.eq.s32.totalorder %s15, 2
      %p44 = por %p42, %p43
      %p45 = scmp.ne.s32.totalorder %s37, %s40
      %p46 = scmp.eq.s32.totalorder %s15, 0
      %p47 = por %p45, %p46
      %p48 = scmp.ne.s32.totalorder %s37, %s40
      %p49 = scmp.eq.s32.totalorder %s20, 2
      %p50 = por %p48, %p49
      %p51 = scmp.ne.s32.totalorder %s40, %s41
      %p52 = scmp.eq.s32.totalorder %s20, 0
      %p53 = por %p51, %p52
      %p54 = scmp.ne.s32.totalorder %s40, %s41
      %p55 = scmp.eq.s32.totalorder %s21, 2
      %p56 = por %p54, %p55
      %p58 = scmp.ne.s32.totalorder %s41, %s57
      %p59 = scmp.eq.s32.totalorder %s21, 0
      %p60 = por %p58, %p59
      %s62 = sadd.s32 %s61, 1
      %p65 = scmp.eq.s32.totalorder %s15, 2
      %p66 = scmp.ne.s32.totalorder %s61, %s63
      %p67 = scmp.eq.s32.totalorder %s15, 0
      %p68 = por %p66, %p67
      %p69 = scmp.ne.s32.totalorder %s61, %s63
      %p70 = scmp.eq.s32.totalorder %s20, 2
      %p71 = por %p69, %p70
      %p72 = scmp.ne.s32.totalorder %s63, %s64
      %p73 = scmp.eq.s32.totalorder %s20, 0
      %p74 = por %p72, %p73
      %p75 = scmp.ne.s32.totalorder %s63, %s64
      %p76 = scmp.eq.s32.totalorder %s21, 2
      %p77 = por %p75, %p76
      %p79 = scmp.ne.s32.totalorder %s64, %s78
      %p80 = scmp.eq.s32.totalorder %s21, 0
      %p81 = por %p79, %p80
      %s83 = sadd.s32 %s82, 1
      %p86 = scmp.eq.s32.totalorder %s15, 2
      %p87 = scmp.ne.s32.totalorder %s82, %s84
      %p88 = scmp.eq.s32.totalorder %s15, 0
      %p89 = por %p87, %p88
      %p90 = scmp.ne.s32.totalorder %s82, %s84
      %p91 = scmp.eq.s32.totalorder %s20, 2
      %p92 = por %p90, %p91
      %p93 = scmp.ne.s32.totalorder %s84, %s85
      %p94 = scmp.eq.s32.totalorder %s20, 0
      %p95 = por %p93, %p94
      %p96 = scmp.ne.s32.totalorder %s84, %s85
      %p97 = scmp.eq.s32.totalorder %s21, 2
      %p98 = por %p96, %p97
      %p100 = scmp.ne.s32.totalorder %s85, %s99
      %p101 = scmp.eq.s32.totalorder %s21, 0
      %p102 = por %p100, %p101
      %s103 = ssub.s32 %s22, %s34
      %p104 = scmp.eq.s32.totalorder %s103, 0
      %s106 = sadd.s32 %s105, 1
      %s107 = scalar_select %p104, %s105, %s106
      %p110 = pneg %p104
      %p111 = scmp.eq.s32.totalorder %s15, 2
      %p112 = por %p110, %p111
      %p113 = scmp.ne.s32.totalorder %s105, %s108
      %p114 = scmp.eq.s32.totalorder %s15, 0
      %p115 = por %p113, %p114
      %p116 = scmp.ne.s32.totalorder %s105, %s108
      %p117 = scmp.eq.s32.totalorder %s20, 2
      %p118 = por %p116, %p117
      %p119 = scmp.ne.s32.totalorder %s108, %s109
      %p120 = scmp.eq.s32.totalorder %s20, 0
      %p121 = por %p119, %p120
      %p122 = scmp.ne.s32.totalorder %s108, %s109
      %p123 = scmp.eq.s32.totalorder %s21, 2
      %p124 = por %p122, %p123
      %p126 = scmp.ne.s32.totalorder %s109, %s125
      %p127 = scmp.eq.s32.totalorder %s21, 0
      %p128 = por %p126, %p127
      %s129 = ssub.s32 %s22, %s34
      %p130 = scmp.eq.s32.totalorder %s129, 0
      %s132 = sadd.s32 %s131, 1
      %s133 = scalar_select %p130, %s131, %s132
      %p136 = pneg %p130
      %p137 = scmp.eq.s32.totalorder %s15, 2
      %p138 = por %p136, %p137
      %p139 = scmp.ne.s32.totalorder %s131, %s134
      %p140 = scmp.eq.s32.totalorder %s15, 0
      %p141 = por %p139, %p140
      %p142 = scmp.ne.s32.totalorder %s131, %s134
      %p143 = scmp.eq.s32.totalorder %s20, 2
      %p144 = por %p142, %p143
      %p145 = scmp.ne.s32.totalorder %s134, %s135
      %p146 = scmp.eq.s32.totalorder %s20, 0
      %p147 = por %p145, %p146
      %p148 = scmp.ne.s32.totalorder %s134, %s135
      %p149 = scmp.eq.s32.totalorder %s21, 2
      %p150 = por %p148, %p149
      %p152 = scmp.ne.s32.totalorder %s135, %s151
      %p153 = scmp.eq.s32.totalorder %s21, 0
      %p154 = por %p152, %p153
      %p155 = scmp.le.s32.totalorder 1, %s15
      %p156 = scmp.lt.s32.totalorder %s15, 4
      %p157 = pnand %p155, %p156
      %p158 = pneg %p157
      // Predicated region
      $region9: #{tpu_custom_call.1} parent=5 // pred_check
        _
      $region10: #{tpu_custom_call.1} parent=5 // pred_check_branch
        %160 = sbr.rel (%p157) target = $region12
      $region11: #{tpu_custom_call.1} parent=5 // pred_region
        %s161 = ssub.s32 %s15, 1
        // Predicated region
        $region13: #{tpu_custom_call.1} parent=11 // pred_check
          %p162 = pneg %p53
        $region14: #{tpu_custom_call.1} parent=11 // pred_check_branch
          %164 = sbr.rel (%p162) target = $region16
        $region15: #{tpu_custom_call.1} parent=11 // pred_region
          %s166 = ssub.s32 128, 128
          %167 = vsyncadd [#allocation4], %s166
          %s168 = smul.addr %s24, 128
          %s169 = scalar_lea.hbm %s0, %s168
          %s171 = sshll.u32 [#allocation3], 4
          %s172 = int_to_ptr.vmem [resolvable:$true] %s171
          %174 = dma.hbm_to_vmem [thread:$0]  %s169, 128, %s172, [#allocation4]
        $region16: #{tpu_custom_call.1} parent=11 // pred_fallthru
          _
        // Predicated region
        $region17: #{tpu_custom_call.1} parent=11 // pred_check
          %p175 = pneg %p74
        $region18: #{tpu_custom_call.1} parent=11 // pred_check_branch
          %177 = sbr.rel (%p175) target = $region20
        $region19: #{tpu_custom_call.1} parent=11 // pred_region
          %s179 = ssub.s32 3072, 3072
          %180 = vsyncadd [#allocation7], %s179
          %s181 = sshll.u32 [#allocation6], 4
          %s182 = int_to_ptr.vmem [resolvable:$true] %s181
          %187 = dma.hbm_to_vmem [thread:$0]  %s1, 3072, %s182, [#allocation7], 64, 64, 4
        $region20: #{tpu_custom_call.1} parent=11 // pred_fallthru
          _
        // Predicated region
        $region21: #{tpu_custom_call.1} parent=11 // pred_check
          %p188 = pneg %p95
        $region22: #{tpu_custom_call.1} parent=11 // pred_check_branch
          %190 = sbr.rel (%p188) target = $region24
        $region23: #{tpu_custom_call.1} parent=11 // pred_region
          _
        $region24: #{tpu_custom_call.1} parent=11 // pred_fallthru
          _
      $region12: #{tpu_custom_call.1} parent=5 // pred_fallthru
        _
      %p191 = scmp.lt.s32.totalorder %s15, 3
      // Predicated region
      $region25: #{tpu_custom_call.1} parent=5 // pred_check
        %p192 = pneg %p191
      $region26: #{tpu_custom_call.1} parent=5 // pred_check_branch
        %194 = sbr.rel (%p192) target = $region28
      $region27: #{tpu_custom_call.1} parent=5 // pred_region
        _
      $region28: #{tpu_custom_call.1} parent=5 // pred_fallthru
        _
      %p195 = scmp.le.s32.totalorder 1, %s15
      %p196 = scmp.lt.s32.totalorder %s15, 4
      %p197 = pnand %p195, %p196
      %p198 = pneg %p197
      // Predicated region
      $region29: #{tpu_custom_call.1} parent=5 // pred_check
        _
      $region30: #{tpu_custom_call.1} parent=5 // pred_check_branch
        %200 = sbr.rel (%p197) target = $region32
      $region31: #{tpu_custom_call.1} parent=5 // pred_region
        %s201 = ssub.s32 %s15, 1
        // Predicated region
        $region33: #{tpu_custom_call.1} parent=31 // pred_check
          %p202 = pneg %p53
        $region34: #{tpu_custom_call.1} parent=31 // pred_check_branch
          %204 = sbr.rel (%p202) target = $region36
        $region35: #{tpu_custom_call.1} parent=31 // pred_region
          %205 = dma.done [#allocation4], 128
        $region36: #{tpu_custom_call.1} parent=31 // pred_fallthru
          _
        // Predicated region
        $region37: #{tpu_custom_call.1} parent=31 // pred_check
          %p206 = pneg %p74
        $region38: #{tpu_custom_call.1} parent=31 // pred_check_branch
          %208 = sbr.rel (%p206) target = $region40
        $region39: #{tpu_custom_call.1} parent=31 // pred_region
          %209 = dma.done [#allocation7], 3072
        $region40: #{tpu_custom_call.1} parent=31 // pred_fallthru
          _
        %p210 = pneg %p53
        %p211 = pneg %p50
        %p212 = pneg %p74
        %p213 = pneg %p71
        %p214 = pneg %p95
        %p215 = pneg %p92
        %p216 = pneg %p121
        %p217 = pneg %p118
        %p218 = pneg %p147
        %p219 = pneg %p144
        %p221 = scmp.eq.s32.totalorder %s25, 0
        // Predicated region
        $region41: #{tpu_custom_call.1} parent=31 // pred_check
          %p222 = pneg %p221
        $region42: #{tpu_custom_call.1} parent=31 // pred_check_branch
          %224 = sbr.rel (%p222) target = $region44
        $region43: #{tpu_custom_call.1} parent=31 // pred_region
          %v225 = vld [vmem:[#allocation3] sm:$0xff]
          %v226 = vpack.c.bf16 %v225, %v225
          %227 = vst [vmem:[#allocation2] sm:$0xf] %v226
        $region44: #{tpu_custom_call.1} parent=31 // pred_fallthru
          _
        %s228 = smul.u32 %s25, 16
        %s229 = smul.addr %s228, 4
        %s230 = scalar_lea.vmem [#allocation6], %s229
        %v231 = vld [vmem:[%s230] sm:$0xf]
        %v232 = vld [vmem:[%s230 + $0x4] sm:$0xf]
        %v233 = vld [vmem:[%s230 + $0x8] sm:$0xf]
        %v234 = vld [vmem:[%s230 + $0xc] sm:$0xf]
        %v235 = vld [vmem:[%s230 + $0x10] sm:$0xf]
        %v236 = vld [vmem:[%s230 + $0x14] sm:$0xf]
        %v237 = vld [vmem:[%s230 + $0x18] sm:$0xf]
        %v238 = vld [vmem:[%s230 + $0x1c] sm:$0xf]
        %v239 = vld [vmem:[%s230 + $0x20] sm:$0xf]
        %v240 = vld [vmem:[%s230 + $0x24] sm:$0xf]
        %v241 = vld [vmem:[%s230 + $0x28] sm:$0xf]
        %v242 = vld [vmem:[%s230 + $0x2c] sm:$0xf]
        %v243 = vld [vmem:[%s230 + $0x30] sm:$0xf]
        %v244 = vld [vmem:[%s230 + $0x34] sm:$0xf]
        %v245 = vld [vmem:[%s230 + $0x38] sm:$0xf]
        %v246 = vld [vmem:[%s230 + $0x3c] sm:$0xf]
        %s247 = scalar_lea.vmem %s2, %s25
        %v248 = vld [vmem:[%s247] sm:$0x1]
        %v249 = vld [vmem:[#allocation2] sm:$0xf]
        %v251 = vlaneseq
        %v252 = vshrl.u32 %v251, 7
        %v253 = vsub.s32 0, %v252
        %v254 = vrot.slane %v248, %v253
        %v272 = vunpack.c.l.b16 %v231
        %v273 = vunpack.c.l.b16 %v232
        %v274 = vunpack.c.l.b16 %v233
        %v275 = vunpack.c.l.b16 %v234
        %v276 = vunpack.c.l.b16 %v235
        %v277 = vunpack.c.l.b16 %v236
        %v278 = vunpack.c.l.b16 %v237
        %v279 = vunpack.c.l.b16 %v238
        %v280 = vunpack.c.l.b16 %v239
        %v281 = vunpack.c.l.b16 %v240
        %v282 = vunpack.c.l.b16 %v241
        %v283 = vunpack.c.l.b16 %v242
        %v284 = vunpack.c.l.b16 %v243
        %v285 = vunpack.c.l.b16 %v244
        %v286 = vunpack.c.l.b16 %v245
        %v287 = vunpack.c.l.b16 %v246
        %v288 = vpack.c.b16 %v273, %v272
        %v289 = vpack.c.b16 %v275, %v274
        %v290 = vpack.c.b16 %v277, %v276
        %v291 = vpack.c.b16 %v279, %v278
        %v292 = vpack.c.b16 %v281, %v280
        %v293 = vpack.c.b16 %v283, %v282
        %v294 = vpack.c.b16 %v285, %v284
        %v295 = vpack.c.b16 %v287, %v286
        %304 = vmatprep.subr.bf16.mxu0 0
        %305 = vmatpush1.bf16.msra.mxu0 %v295
        %306 = vmatprep.subr.bf16.mxu0 0
        %307 = vmatpush1.bf16.msra.mxu0 %v294
        %308 = vmatprep.subr.bf16.mxu0 0
        %309 = vmatpush1.bf16.msra.mxu0 %v293
        %310 = vmatprep.subr.bf16.mxu0 0
        %311 = vmatpush1.bf16.msra.mxu0 %v292
        %312 = vmatprep.subr.bf16.mxu0 0
        %313 = vmatpush1.bf16.msra.mxu0 %v291
        %314 = vmatprep.subr.bf16.mxu0 0
        %315 = vmatpush1.bf16.msra.mxu0 %v290
        %316 = vmatprep.subr.bf16.mxu0 0
        %317 = vmatpush1.bf16.msra.mxu0 %v289
        %318 = vmatprep.subr.bf16.mxu0 0
        %319 = vmatpush1.bf16.msra.mxu0 %v288
        %320 = vmatprep.subr.bf16.mxu0 0
        %321 = vmatpush2.bf16.msra.mxu0 0
        %322 = vmatprep.subr.bf16.mxu0 0
        %323 = vmatpush2.bf16.msra.mxu0 0
        %324 = vmatprep.subr.bf16.mxu0 0
        %325 = vmatpush2.bf16.msra.mxu0 0
        %326 = vmatprep.subr.bf16.mxu0 0
        %327 = vmatpush2.bf16.msra.mxu0 0
        %328 = vmatprep.subr.bf16.mxu0 0
        %329 = vmatpush2.bf16.msra.mxu0 0
        %330 = vmatprep.subr.bf16.mxu0 0
        %331 = vmatpush2.bf16.msra.mxu0 0
        %332 = vmatprep.subr.bf16.mxu0 0
        %333 = vmatpush2.bf16.msra.mxu0 0
        %334 = vmatprep.subr.bf16.mxu0 0
        %335 = vmatpush2.bf16.msra.mxu0 0
        %336 = vmatprep.mubr.bf16.mxu0 0
        %337 = vmatmul.mubr.bf16.gmra.mxu0 %v249
        %v338 = vpop.f32.mrf.mxu0
        %v339 = vadd.f32 %v254, %v338
        %v340 = vpop.f32.mrf.mxu0
        %v341 = vpop.f32.mrf.mxu0
        %v342 = vpop.f32.mrf.mxu0
        %343 = vdwg.mxu0
        %v344 = vmax.f32 %v339, 0.0
        %p345 = scmp.lt.s32.totalorder %s25, 2
        // Predicated region
        $region45: #{tpu_custom_call.1} parent=31 // pred_check
          %p346 = pneg %p345
        $region46: #{tpu_custom_call.1} parent=31 // pred_check_branch
          %348 = sbr.rel (%p346) target = $region48
        $region47: #{tpu_custom_call.1} parent=31 // pred_region
          %v349 = vpack.c.bf16 %v344, %v344
          %350 = vst [vmem:[#allocation2] sm:$0xf] %v349
        $region48: #{tpu_custom_call.1} parent=31 // pred_fallthru
          _
        %p351 = scmp.eq.s32.totalorder %s25, 2
        // Predicated region
        $region49: #{tpu_custom_call.1} parent=31 // pred_check
          %p352 = pneg %p351
        $region50: #{tpu_custom_call.1} parent=31 // pred_check_branch
          %354 = sbr.rel (%p352) target = $region52
        $region51: #{tpu_custom_call.1} parent=31 // pred_region
          %355 = vst [vmem:[#allocation8] sm:$0xff] %v344
          %v356 = vlaneseq
          %v357 = vshrl.u32 %v356, 7
          %s358 = smul.u32 %s24, 8
          %v359 = vstv %s358
          %v360 = vadd.s32 %v357, %v359
          %vm361 = vcmp.lt.s32.totalorder %v360, 8
          %v362 = vsel %vm361, 1, 0
          %vm363 = vcmp.eq.s32.totalorder %v362, 1
          %v364 = vsel %vm363, %v344, 0.0
          %v365 = vrot.slane %v364, 4
          %v366 = vadd.f32 %v364, %v365
          %v367 = vrot.slane %v366, 2
          %v368 = vadd.f32 %v366, %v367
          %v369 = vrot.slane %v368, 1
          %v370 = vadd.f32 %v368, %v369
          %v371 = vmul.f32 %v364, %v364
          %v372 = vrot.slane %v371, 4
          %v373 = vadd.f32 %v371, %v372
          %v374 = vrot.slane %v373, 2
          %v375 = vadd.f32 %v373, %v374
          %v376 = vrot.slane %v375, 1
          %v377 = vadd.f32 %v375, %v376
          %vm378 = vcmp.lt.s32.totalorder %v357, 4
          %v379 = vsel %vm378, %v370, %v377
          %380 = vst [vmem:[#allocation9] sm:$0xff] %v379
        $region52: #{tpu_custom_call.1} parent=31 // pred_fallthru
          _
        // Predicated region
        $region53: #{tpu_custom_call.1} parent=31 // pred_check
          %p381 = pneg %p118
        $region54: #{tpu_custom_call.1} parent=31 // pred_check_branch
          %383 = sbr.rel (%p381) target = $region56
        $region55: #{tpu_custom_call.1} parent=31 // pred_region
          %s385 = ssub.s32 128, 128
          %386 = vsyncadd [#allocation5], %s385
          %s387 = smul.addr %s24, 128
          %s388 = scalar_lea.hbm %s3, %s387
          %s390 = sshll.u32 [#allocation8], 4
          %s391 = int_to_ptr.vmem [resolvable:$true] %s390
          %393 = dma.vmem_to_hbm [thread:$0]  %s391, 128, %s388, [#allocation5]
        $region56: #{tpu_custom_call.1} parent=31 // pred_fallthru
          _
        // Predicated region
        $region57: #{tpu_custom_call.1} parent=31 // pred_check
          %p394 = pneg %p144
        $region58: #{tpu_custom_call.1} parent=31 // pred_check_branch
          %396 = sbr.rel (%p394) target = $region60
        $region59: #{tpu_custom_call.1} parent=31 // pred_region
          %s398 = ssub.s32 128, 128
          %399 = vsyncadd [#allocation10], %s398
          %s400 = smul.addr %s24, 128
          %s401 = scalar_lea.hbm %s4, %s400
          %s403 = sshll.u32 [#allocation9], 4
          %s404 = int_to_ptr.vmem [resolvable:$true] %s403
          %406 = dma.vmem_to_hbm [thread:$0]  %s404, 128, %s401, [#allocation10]
        $region60: #{tpu_custom_call.1} parent=31 // pred_fallthru
          _
        // Predicated region
        $region61: #{tpu_custom_call.1} parent=31 // pred_check
          %p407 = pneg %p118
        $region62: #{tpu_custom_call.1} parent=31 // pred_check_branch
          %409 = sbr.rel (%p407) target = $region64
        $region63: #{tpu_custom_call.1} parent=31 // pred_region
          %410 = dma.done [#allocation5], 128
        $region64: #{tpu_custom_call.1} parent=31 // pred_fallthru
          _
        // Predicated region
        $region65: #{tpu_custom_call.1} parent=31 // pred_check
          %p411 = pneg %p144
        $region66: #{tpu_custom_call.1} parent=31 // pred_check_branch
          %413 = sbr.rel (%p411) target = $region68
        $region67: #{tpu_custom_call.1} parent=31 // pred_region
          %414 = dma.done [#allocation10], 128
        $region68: #{tpu_custom_call.1} parent=31 // pred_fallthru
          _
      $region32: #{tpu_custom_call.1} parent=5 // pred_fallthru
        _
      %p415 = scmp.le.s32.totalorder 2, %s15
      // Predicated region
      $region69: #{tpu_custom_call.1} parent=5 // pred_check
        %p416 = pneg %p415
      $region70: #{tpu_custom_call.1} parent=5 // pred_check_branch
        %418 = sbr.rel (%p416) target = $region72
      $region71: #{tpu_custom_call.1} parent=5 // pred_region
        %s419 = ssub.s32 %s15, 2
      $region72: #{tpu_custom_call.1} parent=5 // pred_fallthru
        _
    $region6: #{tpu_custom_call.1} parent=1 // loop_footer
      %s19 = sadd.s32 1, %s15
    $region7: #{tpu_custom_call.1} parent=1 // loop_footer_branch
      %14 = sbr.rel target = $region3
    $region8: #{tpu_custom_call.1} parent=1 // loop_exit
      _
    %420 = vsyncpa [#allocation4], 1
    %s421 = scalar_lea.sflag [#allocation4], 1
    %422 = vsyncpa %s421, 1
    %423 = vsyncpa [#allocation7], 1
    %424 = vsyncpa [#allocation5], 1
    %s425 = scalar_lea.sflag [#allocation5], 1
    %426 = vsyncpa %s425, 1
    %427 = vsyncpa [#allocation10], 1

</llo_original>
